<compile_context>
chip_gen: v7x
topology: tpu7x:2x2x1
jax: 0.10.0
libtpu: 0.0.40
codegen_flags: <defaults>
</compile_context>

<pallas_src>
import math

import jax
import jax.numpy as jnp
from jax.experimental import pallas as pl
from jax.experimental.pallas import tpu as pltpu


def _vmem_limit_bytes():
    # Generation-aware scoped-VMEM limit: ~half of physical, capped at 64 MiB (v7x physical),
    # with a safe 32 MiB fallback when the query is unavailable.
    try:
        cap = pltpu.get_tpu_info().vmem_capacity_bytes
        return int(min(max(cap // 2, 32 * 1024 * 1024), 64 * 1024 * 1024))
    except Exception:
        return 32 * 1024 * 1024


VMEM_LIMIT_BYTES = _vmem_limit_bytes()


def _gelu(x):
    # exact (erf-based) GELU, matching torch.nn.GELU() default
    return 0.5 * x * (1.0 + jax.lax.erf(x * 0.7071067811865476))


# ----------------------------------------------------------------------------
# Kernel 1: fully fused 2D stream + Classifier (one pallas_call, grid over batch)
# ----------------------------------------------------------------------------
def fused_embed_classifier_kernel(p_ref, wemb_ref, bemb_ref, pe_ref,
                                  w1_ref, b1_ref, w2_ref, b2_ref,
                                  w3_ref, b3_ref, o_ref):
    """One batch element end-to-end.

    p_ref  : (1, Sy, Cp) bf16   im2col patches of one batch element
    wemb   : (Cp, E)     bf16   W_patch2d @ W_proj2d            (resident)
    bemb   : (1, E)      f32    b_patch2d @ W_proj2d + b_proj2d (resident)
    pe_ref : (Sy, E)     f32    positional embedding pe_y       (resident)
    w1     : (E, H)      bf16   fc1 weight (resident);  b1: (1, H) f32
    w2     : (1, H)      f32    fc2 weight as a row -> VPU multiply + lane reduce
    b2     : (1, 1)      f32
    w3     : (Sy, 1)     f32    fc3 weight as a column -> weighted sublane reduce (no kron)
    b3     : (1, 1)      f32
    o_ref  : (1, 1, 1)   f32    sigmoid output for this batch element
    """
    # patch-embed conv + proj (folded) on the MXU, epilogue add of bias + positional embedding
    tok = jnp.dot(p_ref[0], wemb_ref[...], preferred_element_type=jnp.float32)
    tok = tok + bemb_ref[...] + pe_ref[...]                                   # (Sy, E) f32

    # Classifier: fc1 (MXU) -> GELU -> fc2 (VPU mul + lane reduce) -> GELU -> fc3 -> sigmoid
    h = _gelu(jnp.dot(tok.astype(jnp.bfloat16), w1_ref[...],
                      preferred_element_type=jnp.float32) + b1_ref[...])      # (Sy, H)
    s = _gelu(jnp.sum(h * w2_ref[...], axis=-1, keepdims=True) + b2_ref[...])  # (Sy, 1)
    logit = jnp.sum(s * w3_ref[...], axis=0, keepdims=True) + b3_ref[...]      # (1, 1)
    o_ref[0] = jax.nn.sigmoid(logit)


def fused_embed_classifier(patches_bf16, w_emb, b_emb, pe, w1, b1, w2_row, b2, w3_col, b3):
    """patches (B, Sy, Cp) bf16 -> (B, 1) f32 : embed + proj + pe + full Classifier, one launch."""
    B, Sy, Cp = patches_bf16.shape
    E = w_emb.shape[1]
    H = w1.shape[1]
    out = pl.pallas_call(
        fused_embed_classifier_kernel,
        out_shape=jax.ShapeDtypeStruct((B, 1, 1), jnp.float32),
        grid=(B,),
        in_specs=[
            pl.BlockSpec((1, Sy, Cp), lambda b: (b, 0, 0)),   # this batch element's patches
            pl.BlockSpec((Cp, E), lambda b: (0, 0)),          # fused embed weight (resident)
            pl.BlockSpec((1, E), lambda b: (0, 0)),           # fused embed bias   (resident)
            pl.BlockSpec((Sy, E), lambda b: (0, 0)),          # pe_y               (resident)
            pl.BlockSpec((E, H), lambda b: (0, 0)),           # fc1 weight         (resident)
            pl.BlockSpec((1, H), lambda b: (0, 0)),           # fc1 bias
            pl.BlockSpec((1, H), lambda b: (0, 0)),           # fc2 weight row
            pl.BlockSpec((1, 1), lambda b: (0, 0)),           # fc2 bias
            pl.BlockSpec((Sy, 1), lambda b: (0, 0)),          # fc3 weight column
            pl.BlockSpec((1, 1), lambda b: (0, 0)),           # fc3 bias
        ],
        out_specs=pl.BlockSpec((1, 1, 1), lambda b: (b, 0, 0)),
        compiler_params=pltpu.CompilerParams(
            dimension_semantics=("parallel",),
            vmem_limit_bytes=VMEM_LIMIT_BYTES),
    )(patches_bf16, w_emb, b_emb, pe, w1, b1, w2_row, b2, w3_col, b3)
    return out.reshape(B, 1)


# ----------------------------------------------------------------------------
# Kernel 2: (gated) 3D patch-embed + proj + pe_x — dead work while the Transformer
#           is an identity placeholder, kept for semantic completeness.
# ----------------------------------------------------------------------------
def embed_fused_kernel(p_ref, w_ref, b_ref, pe_ref, o_ref):
    acc = jnp.dot(p_ref[0], w_ref[...], preferred_element_type=jnp.float32)
    o_ref[0] = acc + b_ref[...] + pe_ref[...]


def fused_patch_embed(patches_bf16, w_fused, b_fused, pe):
    """patches (B, S, Cp) bf16 -> (B, S, E) f32 = patches @ W_fused + b_fused + pe."""
    B, S, Cp = patches_bf16.shape
    E = w_fused.shape[1]
    return pl.pallas_call(
        embed_fused_kernel,
        out_shape=jax.ShapeDtypeStruct((B, S, E), jnp.float32),
        grid=(B,),
        in_specs=[
            pl.BlockSpec((1, S, Cp), lambda b: (b, 0, 0)),
            pl.BlockSpec((Cp, E), lambda b: (0, 0)),
            pl.BlockSpec((1, E), lambda b: (0, 0)),
            pl.BlockSpec((S, E), lambda b: (0, 0)),
        ],
        out_specs=pl.BlockSpec((1, S, E), lambda b: (b, 0, 0)),
        compiler_params=pltpu.CompilerParams(
            dimension_semantics=("parallel",),
            vmem_limit_bytes=VMEM_LIMIT_BYTES),
    )(patches_bf16, w_fused, b_fused, pe)


# ----------------------------------------------------------------------------
# Plain-JAX glue: patch extraction (im2col for stride==kernel convs)
# ----------------------------------------------------------------------------
def extract_patches_3d(x, patch):
    # x: (B, C, H, W, D) -> (B, nH*nW*nD, C*ph*pw*pd), patch order = (c, dh, dw, dd)
    B, C, H, W, D = x.shape
    ph, pw, pd = patch
    nh, nw, nd = H // ph, W // pw, D // pd
    x = x.reshape(B, C, nh, ph, nw, pw, nd, pd)
    x = x.transpose(0, 2, 4, 6, 1, 3, 5, 7)
    return x.reshape(B, nh * nw * nd, C * ph * pw * pd)


def extract_patches_2d(x, patch):
    # x: (B, C, H, W) -> (B, nH*nW, C*ph*pw), patch order = (c, dh, dw)
    B, C, H, W = x.shape
    ph, pw = patch
    nh, nw = H // ph, W // pw
    x = x.reshape(B, C, nh, ph, nw, pw)
    x = x.transpose(0, 2, 4, 1, 3, 5)
    return x.reshape(B, nh * nw, C * ph * pw)


# ----------------------------------------------------------------------------
# Deterministic parameter initialization (PyTorch-default-style uniform)
# ----------------------------------------------------------------------------
def _linear_init(key, fan_in, fan_out):
    k1, k2 = jax.random.split(key)
    bound = 1.0 / math.sqrt(fan_in)
    w = jax.random.uniform(k1, (fan_in, fan_out), jnp.float32, -bound, bound)
    b = jax.random.uniform(k2, (1, fan_out), jnp.float32, -bound, bound)
    return w, b


def init_params(key, cfg, c3d_in, c2d_in, seq_x, seq_y):
    E = cfg["n_embed"]
    ph3, pw3, pd3 = cfg["n_patch3d"]
    ph2, pw2 = cfg["n_patch2d"]
    cp3 = c3d_in * ph3 * pw3 * pd3
    cp2 = c2d_in * ph2 * pw2
    hidden = 4 * E

    keys = jax.random.split(key, 10)
    params = {}
    params["w_pe3"], params["b_pe3"] = _linear_init(keys[0], cp3, E)      # PatchEmbed3D conv
    params["w_pe2"], params["b_pe2"] = _linear_init(keys[1], cp2, E)      # PatchEmbed2D conv
    params["w_proj3"], params["b_proj3"] = _linear_init(keys[2], E, E)    # proj3d
    params["w_proj2"], params["b_proj2"] = _linear_init(keys[3], E, E)    # proj2d
    params["pe_x"] = jax.random.normal(keys[4], (1, seq_x, E), jnp.float32) * 0.001
    params["pe_y"] = jax.random.normal(keys[5], (1, seq_y, E), jnp.float32) * 0.001
    params["w_fc1"], params["b_fc1"] = _linear_init(keys[6], E, hidden)   # Classifier.fc1
    params["w_fc2"], params["b_fc2"] = _linear_init(keys[7], hidden, 1)   # Classifier.fc2
    params["w_fc3"], params["b_fc3"] = _linear_init(keys[8], seq_y, 1)    # Classifier.fc3
    return params


# ----------------------------------------------------------------------------
# Forward pass
# ----------------------------------------------------------------------------
def transformer_model_forward(params, x, y, cfg, *, run_unused_3d_stream=False):
    E = cfg["n_embed"]
    H = params["w_fc1"].shape[1]

    # Fold the (patch-embed conv, proj Linear) weight pair into a single matmul (tiny, folded
    # once under jit).
    w2f = (params["w_pe2"] @ params["w_proj2"]).astype(jnp.bfloat16)
    b2f = (params["b_pe2"] @ params["w_proj2"] + params["b_proj2"]).astype(jnp.float32)

    # --- 2D stream + Classifier, fully fused in one pallas_call.
    # Cast to bf16 BEFORE the im2col relayout so XLA moves half the bytes.
    p2 = extract_patches_2d(y[:, 0:1].astype(jnp.bfloat16), cfg["n_patch2d"])   # (B, Sy, Cp2)
    out = fused_embed_classifier(
        p2, w2f, b2f, params["pe_y"][0],
        params["w_fc1"].astype(jnp.bfloat16), params["b_fc1"],
        params["w_fc2"].reshape(1, H), params["b_fc2"],
        params["w_fc3"], params["b_fc3"])                                       # (B, 1)

    # --- 3D stream: PatchEmbed3D(x) -> proj3d -> + pe_x
    # TODO(synk): the Transformer encoder class is not defined in the source module; it is
    # treated as an identity pass-through here, so the 3D stream never reaches the output.
    # It is gated OFF by default (pure dead work); re-enable when a real encoder exists.
    if run_unused_3d_stream:
        w3f = (params["w_pe3"] @ params["w_proj3"]).astype(jnp.bfloat16)
        b3f = (params["b_pe3"] @ params["w_proj3"] + params["b_proj3"]).astype(jnp.float32)
        p3 = extract_patches_3d(x.astype(jnp.bfloat16), cfg["n_patch3d"])       # (B, Sx, Cp3)
        _ = fused_patch_embed(p3, w3f, b3f, params["pe_x"][0])                  # (B, Sx, E)

    return out


# ----------------------------------------------------------------------------
if __name__ == "__main__":
    # Small, self-consistent shapes (seq lengths multiples of 8 for clean tiling)
    cfg = dict(n_embed=32, n_patch3d=(4, 4, 2), n_patch2d=(8, 8))
    B = 2
    H3, W3, D3 = 8, 8, 4       # CT_image spatial dims (divisible by n_patch3d)
    H2, W2 = 32, 32            # img spatial dims (divisible by n_patch2d)

    seq_x = (H3 // 4) * (W3 // 4) * (D3 // 2)   # 8
    seq_y = (H2 // 8) * (W2 // 8)               # 16

    key = jax.random.PRNGKey(0)
    kx, ky, kp = jax.random.split(key, 3)
    x = jax.random.normal(kx, (B, 1, H3, W3, D3), jnp.float32)   # CT_image, (B,C,H,W,D)
    y = jax.random.normal(ky, (B, 3, H2, W2), jnp.float32)       # img, NCHW (only channel 0 used)

    params = init_params(kp, cfg, c3d_in=1, c2d_in=1, seq_x=seq_x, seq_y=seq_y)

    fwd = jax.jit(lambda p, xx, yy: transformer_model_forward(p, xx, yy, cfg))
    out = jax.block_until_ready(fwd(params, x, y))

    assert out.shape == (B, 1) and out.dtype == jnp.float32
    assert bool(jnp.all(jnp.isfinite(out))) and bool(jnp.all((out >= 0) & (out <= 1)))
    print("KERNEL_OK")
</pallas_src>

<mosaic_0001>
module attributes {stable_mosaic.version = 11 : i64} {
  func.func @fused_embed_classifier_kernel(%arg0: i32, %arg1: memref<1x16x64xbf16, #tpu.memory_space<vmem>>, %arg2: memref<64x32xbf16, #tpu.memory_space<vmem>>, %arg3: memref<1x32xf32, #tpu.memory_space<vmem>>, %arg4: memref<16x32xf32, #tpu.memory_space<vmem>>, %arg5: memref<32x128xbf16, #tpu.memory_space<vmem>>, %arg6: memref<1x128xf32, #tpu.memory_space<vmem>>, %arg7: memref<1x128xf32, #tpu.memory_space<vmem>>, %arg8: memref<1x1xf32, #tpu.memory_space<vmem>>, %arg9: memref<16x1xf32, #tpu.memory_space<vmem>>, %arg10: memref<1x1xf32, #tpu.memory_space<vmem>>, %arg11: memref<1x1x1xf32, #tpu.memory_space<vmem>>) attributes {dimension_semantics = [#tpu.dimension_semantics<parallel>], iteration_bounds = array<i64: 2>, scalar_prefetch = 0 : i64, scratch_operands = 0 : i64, tpu.core_type = #tpu.core_type<tc>, window_params = [{transform_indices = @transform_0, window_bounds = array<i64: 1, 16, 64>}, {pipeline_mode = #tpu.pipeline_mode<synchronous>, transform_indices = @transform_1, window_bounds = array<i64: 64, 32>}, {pipeline_mode = #tpu.pipeline_mode<synchronous>, transform_indices = @transform_2, window_bounds = array<i64: 1, 32>}, {pipeline_mode = #tpu.pipeline_mode<synchronous>, transform_indices = @transform_3, window_bounds = array<i64: 16, 32>}, {pipeline_mode = #tpu.pipeline_mode<synchronous>, transform_indices = @transform_4, window_bounds = array<i64: 32, 128>}, {pipeline_mode = #tpu.pipeline_mode<synchronous>, transform_indices = @transform_5, window_bounds = array<i64: 1, 128>}, {pipeline_mode = #tpu.pipeline_mode<synchronous>, transform_indices = @transform_6, window_bounds = array<i64: 1, 128>}, {pipeline_mode = #tpu.pipeline_mode<synchronous>, transform_indices = @transform_7, window_bounds = array<i64: 1, 1>}, {pipeline_mode = #tpu.pipeline_mode<synchronous>, transform_indices = @transform_8, window_bounds = array<i64: 16, 1>}, {pipeline_mode = #tpu.pipeline_mode<synchronous>, transform_indices = @transform_9, window_bounds = array<i64: 1, 1>}, {transform_indices = @transform_10, window_bounds = array<i64: 1, 1, 1>}]} {
    %c0 = arith.constant 0 : index
    %c0_0 = arith.constant 0 : index
    %c0_1 = arith.constant 0 : index
    %0 = vector.load %arg1[%c0, %c0_0, %c0_1] : memref<1x16x64xbf16, #tpu.memory_space<vmem>>, vector<1x16x64xbf16>
    %1 = vector.shape_cast %0 : vector<1x16x64xbf16> to vector<16x64xbf16>
    %c0_2 = arith.constant 0 : index
    %c0_3 = arith.constant 0 : index
    %2 = vector.load %arg2[%c0_2, %c0_3] : memref<64x32xbf16, #tpu.memory_space<vmem>>, vector<64x32xbf16>
    %cst = arith.constant dense<0.000000e+00> : vector<16x32xf32>
    %3 = tpu.matmul %1, %2, %cst {dimension_numbers = #tpu.dot_dimension_numbers<[1], [0], [0], [1], [0, 0, 1, 1], [], []>} : vector<16x64xbf16>, vector<64x32xbf16>, vector<16x32xf32> -> vector<16x32xf32>
    %c0_4 = arith.constant 0 : index
    %c0_5 = arith.constant 0 : index
    %4 = vector.load %arg3[%c0_4, %c0_5] : memref<1x32xf32, #tpu.memory_space<vmem>>, vector<1x32xf32>
    %5 = vector.broadcast %4 : vector<1x32xf32> to vector<16x32xf32>
    %6 = arith.addf %3, %5 : vector<16x32xf32>
    %c0_6 = arith.constant 0 : index
    %c0_7 = arith.constant 0 : index
    %7 = vector.load %arg4[%c0_6, %c0_7] : memref<16x32xf32, #tpu.memory_space<vmem>>, vector<16x32xf32>
    %8 = arith.addf %6, %7 : vector<16x32xf32>
    %9 = arith.truncf %8 : vector<16x32xf32> to vector<16x32xbf16>
    %c0_8 = arith.constant 0 : index
    %c0_9 = arith.constant 0 : index
    %10 = vector.load %arg5[%c0_8, %c0_9] : memref<32x128xbf16, #tpu.memory_space<vmem>>, vector<32x128xbf16>
    %cst_10 = arith.constant dense<0.000000e+00> : vector<16x128xf32>
    %11 = tpu.matmul %9, %10, %cst_10 {dimension_numbers = #tpu.dot_dimension_numbers<[1], [0], [0], [1], [0, 0, 1, 1], [], []>} : vector<16x32xbf16>, vector<32x128xbf16>, vector<16x128xf32> -> vector<16x128xf32>
    %c0_11 = arith.constant 0 : index
    %c0_12 = arith.constant 0 : index
    %12 = vector.load %arg6[%c0_11, %c0_12] : memref<1x128xf32, #tpu.memory_space<vmem>>, vector<1x128xf32>
    %13 = vector.broadcast %12 : vector<1x128xf32> to vector<16x128xf32>
    %14 = arith.addf %11, %13 : vector<16x128xf32>
    %cst_13 = arith.constant 5.000000e-01 : f32
    %15 = vector.broadcast %cst_13 : f32 to vector<16x128xf32>
    %16 = arith.mulf %15, %14 : vector<16x128xf32>
    %cst_14 = arith.constant 0.707106769 : f32
    %17 = vector.broadcast %cst_14 : f32 to vector<16x128xf32>
    %18 = arith.mulf %14, %17 : vector<16x128xf32>
    %19 = math.erf %18 : vector<16x128xf32>
    %cst_15 = arith.constant 1.000000e+00 : f32
    %20 = vector.broadcast %cst_15 : f32 to vector<16x128xf32>
    %21 = arith.addf %20, %19 : vector<16x128xf32>
    %22 = arith.mulf %16, %21 : vector<16x128xf32>
    %c0_16 = arith.constant 0 : index
    %c0_17 = arith.constant 0 : index
    %23 = vector.load %arg7[%c0_16, %c0_17] : memref<1x128xf32, #tpu.memory_space<vmem>>, vector<1x128xf32>
    %24 = vector.broadcast %23 : vector<1x128xf32> to vector<16x128xf32>
    %25 = arith.mulf %22, %24 : vector<16x128xf32>
    %cst_18 = arith.constant dense<0.000000e+00> : vector<16xf32>
    %26 = vector.multi_reduction <add>, %25, %cst_18 [1] : vector<16x128xf32> to vector<16xf32>
    %27 = vector.shape_cast %26 : vector<16xf32> to vector<16x1xf32>
    %c0_19 = arith.constant 0 : index
    %c0_20 = arith.constant 0 : index
    %28 = vector.load %arg8[%c0_19, %c0_20] : memref<1x1xf32, #tpu.memory_space<vmem>>, vector<1x1xf32>
    %29 = vector.broadcast %28 : vector<1x1xf32> to vector<16x1xf32>
    %30 = arith.addf %27, %29 : vector<16x1xf32>
    %cst_21 = arith.constant 5.000000e-01 : f32
    %31 = vector.broadcast %cst_21 : f32 to vector<16x1xf32>
    %32 = arith.mulf %31, %30 : vector<16x1xf32>
    %cst_22 = arith.constant 0.707106769 : f32
    %33 = vector.broadcast %cst_22 : f32 to vector<16x1xf32>
    %34 = arith.mulf %30, %33 : vector<16x1xf32>
    %35 = math.erf %34 : vector<16x1xf32>
    %cst_23 = arith.constant 1.000000e+00 : f32
    %36 = vector.broadcast %cst_23 : f32 to vector<16x1xf32>
    %37 = arith.addf %36, %35 : vector<16x1xf32>
    %38 = arith.mulf %32, %37 : vector<16x1xf32>
    %c0_24 = arith.constant 0 : index
    %c0_25 = arith.constant 0 : index
    %39 = vector.load %arg9[%c0_24, %c0_25] : memref<16x1xf32, #tpu.memory_space<vmem>>, vector<16x1xf32>
    %40 = arith.mulf %38, %39 : vector<16x1xf32>
    %cst_26 = arith.constant dense<0.000000e+00> : vector<1xf32>
    %41 = vector.multi_reduction <add>, %40, %cst_26 [0] : vector<16x1xf32> to vector<1xf32>
    %42 = vector.shape_cast %41 : vector<1xf32> to vector<1x1xf32>
    %c0_27 = arith.constant 0 : index
    %c0_28 = arith.constant 0 : index
    %43 = vector.load %arg10[%c0_27, %c0_28] : memref<1x1xf32, #tpu.memory_space<vmem>>, vector<1x1xf32>
    %44 = arith.addf %42, %43 : vector<1x1xf32>
    %45 = arith.negf %44 : vector<1x1xf32>
    %46 = math.exp %45 : vector<1x1xf32>
    %cst_29 = arith.constant 1.000000e+00 : f32
    %47 = vector.broadcast %cst_29 : f32 to vector<1x1xf32>
    %48 = arith.addf %47, %46 : vector<1x1xf32>
    %49 = arith.divf %47, %48 : vector<1x1xf32>
    %c0_30 = arith.constant 0 : index
    %c0_31 = arith.constant 0 : index
    %c0_32 = arith.constant 0 : index
    %50 = vector.load %arg11[%c0_30, %c0_31, %c0_32] : memref<1x1x1xf32, #tpu.memory_space<vmem>>, vector<1x1x1xf32>
    %51 = vector.shape_cast %50 : vector<1x1x1xf32> to vector<1x1xf32>
    %52 = vector.shape_cast %49 : vector<1x1xf32> to vector<1x1x1xf32>
    tpu.vector_store %arg11[%c0_30, %c0_31, %c0_32], %52 {strides = array<i32>} : memref<1x1x1xf32, #tpu.memory_space<vmem>>, vector<1x1x1xf32>,
    return
  }
  func.func @transform_0(%arg0: i32) -> (i32, i32, i32) {
    %c0_i32 = arith.constant 0 : i32
    %c0_i32_0 = arith.constant 0 : i32
    %c0_i32_1 = arith.constant 0 : i32
    return %arg0, %c0_i32, %c0_i32_0 : i32, i32, i32
  }
  func.func @transform_1(%arg0: i32) -> (i32, i32) {
    %c0_i32 = arith.constant 0 : i32
    %c0_i32_0 = arith.constant 0 : i32
    %c0_i32_1 = arith.constant 0 : i32
    return %c0_i32, %c0_i32_0 : i32, i32
  }
  func.func @transform_2(%arg0: i32) -> (i32, i32) {
    %c0_i32 = arith.constant 0 : i32
    %c0_i32_0 = arith.constant 0 : i32
    %c0_i32_1 = arith.constant 0 : i32
    return %c0_i32, %c0_i32_0 : i32, i32
  }
  func.func @transform_3(%arg0: i32) -> (i32, i32) {
    %c0_i32 = arith.constant 0 : i32
    %c0_i32_0 = arith.constant 0 : i32
    %c0_i32_1 = arith.constant 0 : i32
    return %c0_i32, %c0_i32_0 : i32, i32
  }
  func.func @transform_4(%arg0: i32) -> (i32, i32) {
    %c0_i32 = arith.constant 0 : i32
    %c0_i32_0 = arith.constant 0 : i32
    %c0_i32_1 = arith.constant 0 : i32
    return %c0_i32, %c0_i32_0 : i32, i32
  }
  func.func @transform_5(%arg0: i32) -> (i32, i32) {
    %c0_i32 = arith.constant 0 : i32
    %c0_i32_0 = arith.constant 0 : i32
    %c0_i32_1 = arith.constant 0 : i32
    return %c0_i32, %c0_i32_0 : i32, i32
  }
  func.func @transform_6(%arg0: i32) -> (i32, i32) {
    %c0_i32 = arith.constant 0 : i32
    %c0_i32_0 = arith.constant 0 : i32
    %c0_i32_1 = arith.constant 0 : i32
    return %c0_i32, %c0_i32_0 : i32, i32
  }
  func.func @transform_7(%arg0: i32) -> (i32, i32) {
    %c0_i32 = arith.constant 0 : i32
    %c0_i32_0 = arith.constant 0 : i32
    %c0_i32_1 = arith.constant 0 : i32
    return %c0_i32, %c0_i32_0 : i32, i32
  }
  func.func @transform_8(%arg0: i32) -> (i32, i32) {
    %c0_i32 = arith.constant 0 : i32
    %c0_i32_0 = arith.constant 0 : i32
    %c0_i32_1 = arith.constant 0 : i32
    return %c0_i32, %c0_i32_0 : i32, i32
  }
  func.func @transform_9(%arg0: i32) -> (i32, i32) {
    %c0_i32 = arith.constant 0 : i32
    %c0_i32_0 = arith.constant 0 : i32
    %c0_i32_1 = arith.constant 0 : i32
    return %c0_i32, %c0_i32_0 : i32, i32
  }
  func.func @transform_10(%arg0: i32) -> (i32, i32, i32) {
    %c0_i32 = arith.constant 0 : i32
    %c0_i32_0 = arith.constant 0 : i32
    %c0_i32_1 = arith.constant 0 : i32
    return %arg0, %c0_i32, %c0_i32_0 : i32, i32, i32
  }
}

</mosaic_0001>

<llo_original>
// kernel: _lambda_.1
$region0: #{_lambda_.1}
  #allocation0 [shape = 'u32[]', space=smem, size = 0x4, offset = 0x4, fixed_abs, tag = 'smem constant byte address 0x4 - core index']
  #allocation1 [shape = 'u32[144,128]{1,0:T(1,128)}', space=vmem, size = 0x12000, scoped, tag = 'internal scratch']
  #allocation2 [shape = 'f32[1,1]{1,0:T(1,128)S(1)}', space=vmem, size = 0x200, scoped, tag = 'scoped memory for _lambda_.1']
  #allocation3 [shape = 'f32[1,1]{1,0:T(1,128)S(1)}', space=vmem, size = 0x200, scoped, tag = 'scoped memory for _lambda_.1']
  %s0 = inlined_call_operand.vmem [shape: bf16[2,16,64], index: 0, kind: input, shape index: {}]
  %s1 = inlined_call_operand.vmem [shape: bf16[64,32], index: 1, kind: input, shape index: {}]
  %s2 = inlined_call_operand.vmem [shape: f32[1,32], index: 2, kind: input, shape index: {}]
  %s3 = inlined_call_operand.vmem [shape: f32[16,32], index: 3, kind: input, shape index: {}]
  %s4 = inlined_call_operand.vmem [shape: bf16[32,128], index: 4, kind: input, shape index: {}]
  %s5 = inlined_call_operand.vmem [shape: f32[1,128], index: 5, kind: input, shape index: {}]
  %s6 = inlined_call_operand.vmem [shape: f32[1,128], index: 6, kind: input, shape index: {}]
  %s7 = inlined_call_operand.<no memory space> [shape: f32[1,1], index: 7, kind: input, shape index: {}]
  %s8 = inlined_call_operand.vmem [shape: f32[16,1], index: 8, kind: input, shape index: {}]
  %s9 = inlined_call_operand.<no memory space> [shape: f32[1,1], index: 9, kind: input, shape index: {}]
  %s10 = inlined_call_operand.vmem [shape: f32[2,1,1], index: 10, kind: output, shape index: {}]
  %s11 = sld [smem:[#allocation0]]
  $region73: #{_lambda_.1} parent=0
    _
  %s13 = ssub.s32 1, %s11
  %s14 = scalar_select 0, %s13, %s11
  %v15 = vstv %s7
  %16 = vst [vmem:[#allocation2] sm:$0x1] %v15
  %v17 = vstv %s9
  %18 = vst [vmem:[#allocation3] sm:$0x1] %v17
  loop: start=0, step=1, limit=4
  $region2: #{_lambda_.1} parent=0 // loop_pre_header
    _
  $region3: #{_lambda_.1} parent=0 // loop_header
    %s20 = sphi 0, %s24
    %p21 = scmp.ge.s32.totalorder %s20, 4
    %s30 = sphi 0, %s32
    %s33 = sphi 0, %s30
    %s34 = sphi 0, %s33
    %s50 = sphi 0, %s34
    %s54 = sphi 0, %s54
    %s56 = sphi 0, %s54
    %s57 = sphi 0, %s56
    %s71 = sphi 0, %s57
    %s75 = sphi 0, %s75
    %s77 = sphi 0, %s75
    %s78 = sphi 0, %s77
    %s92 = sphi 0, %s78
    %s96 = sphi 0, %s96
    %s98 = sphi 0, %s96
    %s99 = sphi 0, %s98
    %s113 = sphi 0, %s99
    %s117 = sphi 0, %s117
    %s119 = sphi 0, %s117
    %s120 = sphi 0, %s119
    %s134 = sphi 0, %s120
    %s138 = sphi 0, %s138
    %s140 = sphi 0, %s138
    %s141 = sphi 0, %s140
    %s155 = sphi 0, %s141
    %s159 = sphi 0, %s159
    %s161 = sphi 0, %s159
    %s162 = sphi 0, %s161
    %s176 = sphi 0, %s162
    %s180 = sphi 0, %s180
    %s182 = sphi 0, %s180
    %s183 = sphi 0, %s182
    %s197 = sphi 0, %s183
    %s201 = sphi 0, %s201
    %s203 = sphi 0, %s201
    %s204 = sphi 0, %s203
    %s218 = sphi 0, %s204
    %s222 = sphi 0, %s222
    %s224 = sphi 0, %s222
    %s225 = sphi 0, %s224
    %s239 = sphi 0, %s225
    %s245 = sphi 0, %s247
    %s248 = sphi 0, %s245
    %s249 = sphi 0, %s248
    %s265 = sphi 0, %s249
  $region4: #{_lambda_.1} parent=0 // loop_header_branch
    %23 = sbr.rel (%p21) target = $region8
  $region5: #{_lambda_.1} parent=0 // loop_body
    %s25 = ssub.s32 %s20, 1
    %s26 = ssub.s32 %s20, 2
    %s27 = sadd.s32 %s20, 1
    %s28 = ssub.s32 %s20, %s27
    %p29 = scmp.eq.s32.totalorder %s28, 0
    %s31 = sadd.s32 %s30, 1
    %s32 = scalar_select %p29, %s30, %s31
    %p35 = pneg %p29
    %p36 = scmp.eq.s32.totalorder %s20, 1
    %p37 = por %p35, %p36
    %p38 = scmp.ne.s32.totalorder %s30, %s33
    %p39 = scmp.eq.s32.totalorder %s20, 0
    %p40 = por %p38, %p39
    %p41 = scmp.ne.s32.totalorder %s30, %s33
    %p42 = scmp.eq.s32.totalorder %s25, 1
    %p43 = por %p41, %p42
    %p44 = scmp.ne.s32.totalorder %s33, %s34
    %p45 = scmp.eq.s32.totalorder %s25, 0
    %p46 = por %p44, %p45
    %p47 = scmp.ne.s32.totalorder %s33, %s34
    %p48 = scmp.eq.s32.totalorder %s26, 1
    %p49 = por %p47, %p48
    %p51 = scmp.ne.s32.totalorder %s34, %s50
    %p52 = scmp.eq.s32.totalorder %s26, 0
    %p53 = por %p51, %p52
    %s55 = sadd.s32 %s54, 1
    %p58 = scmp.eq.s32.totalorder %s20, 1
    %p59 = scmp.ne.s32.totalorder %s54, %s56
    %p60 = scmp.eq.s32.totalorder %s20, 0
    %p61 = por %p59, %p60
    %p62 = scmp.ne.s32.totalorder %s54, %s56
    %p63 = scmp.eq.s32.totalorder %s25, 1
    %p64 = por %p62, %p63
    %p65 = scmp.ne.s32.totalorder %s56, %s57
    %p66 = scmp.eq.s32.totalorder %s25, 0
    %p67 = por %p65, %p66
    %p68 = scmp.ne.s32.totalorder %s56, %s57
    %p69 = scmp.eq.s32.totalorder %s26, 1
    %p70 = por %p68, %p69
    %p72 = scmp.ne.s32.totalorder %s57, %s71
    %p73 = scmp.eq.s32.totalorder %s26, 0
    %p74 = por %p72, %p73
    %s76 = sadd.s32 %s75, 1
    %p79 = scmp.eq.s32.totalorder %s20, 1
    %p80 = scmp.ne.s32.totalorder %s75, %s77
    %p81 = scmp.eq.s32.totalorder %s20, 0
    %p82 = por %p80, %p81
    %p83 = scmp.ne.s32.totalorder %s75, %s77
    %p84 = scmp.eq.s32.totalorder %s25, 1
    %p85 = por %p83, %p84
    %p86 = scmp.ne.s32.totalorder %s77, %s78
    %p87 = scmp.eq.s32.totalorder %s25, 0
    %p88 = por %p86, %p87
    %p89 = scmp.ne.s32.totalorder %s77, %s78
    %p90 = scmp.eq.s32.totalorder %s26, 1
    %p91 = por %p89, %p90
    %p93 = scmp.ne.s32.totalorder %s78, %s92
    %p94 = scmp.eq.s32.totalorder %s26, 0
    %p95 = por %p93, %p94
    %s97 = sadd.s32 %s96, 1
    %p100 = scmp.eq.s32.totalorder %s20, 1
    %p101 = scmp.ne.s32.totalorder %s96, %s98
    %p102 = scmp.eq.s32.totalorder %s20, 0
    %p103 = por %p101, %p102
    %p104 = scmp.ne.s32.totalorder %s96, %s98
    %p105 = scmp.eq.s32.totalorder %s25, 1
    %p106 = por %p104, %p105
    %p107 = scmp.ne.s32.totalorder %s98, %s99
    %p108 = scmp.eq.s32.totalorder %s25, 0
    %p109 = por %p107, %p108
    %p110 = scmp.ne.s32.totalorder %s98, %s99
    %p111 = scmp.eq.s32.totalorder %s26, 1
    %p112 = por %p110, %p111
    %p114 = scmp.ne.s32.totalorder %s99, %s113
    %p115 = scmp.eq.s32.totalorder %s26, 0
    %p116 = por %p114, %p115
    %s118 = sadd.s32 %s117, 1
    %p121 = scmp.eq.s32.totalorder %s20, 1
    %p122 = scmp.ne.s32.totalorder %s117, %s119
    %p123 = scmp.eq.s32.totalorder %s20, 0
    %p124 = por %p122, %p123
    %p125 = scmp.ne.s32.totalorder %s117, %s119
    %p126 = scmp.eq.s32.totalorder %s25, 1
    %p127 = por %p125, %p126
    %p128 = scmp.ne.s32.totalorder %s119, %s120
    %p129 = scmp.eq.s32.totalorder %s25, 0
    %p130 = por %p128, %p129
    %p131 = scmp.ne.s32.totalorder %s119, %s120
    %p132 = scmp.eq.s32.totalorder %s26, 1
    %p133 = por %p131, %p132
    %p135 = scmp.ne.s32.totalorder %s120, %s134
    %p136 = scmp.eq.s32.totalorder %s26, 0
    %p137 = por %p135, %p136
    %s139 = sadd.s32 %s138, 1
    %p142 = scmp.eq.s32.totalorder %s20, 1
    %p143 = scmp.ne.s32.totalorder %s138, %s140
    %p144 = scmp.eq.s32.totalorder %s20, 0
    %p145 = por %p143, %p144
    %p146 = scmp.ne.s32.totalorder %s138, %s140
    %p147 = scmp.eq.s32.totalorder %s25, 1
    %p148 = por %p146, %p147
    %p149 = scmp.ne.s32.totalorder %s140, %s141
    %p150 = scmp.eq.s32.totalorder %s25, 0
    %p151 = por %p149, %p150
    %p152 = scmp.ne.s32.totalorder %s140, %s141
    %p153 = scmp.eq.s32.totalorder %s26, 1
    %p154 = por %p152, %p153
    %p156 = scmp.ne.s32.totalorder %s141, %s155
    %p157 = scmp.eq.s32.totalorder %s26, 0
    %p158 = por %p156, %p157
    %s160 = sadd.s32 %s159, 1
    %p163 = scmp.eq.s32.totalorder %s20, 1
    %p164 = scmp.ne.s32.totalorder %s159, %s161
    %p165 = scmp.eq.s32.totalorder %s20, 0
    %p166 = por %p164, %p165
    %p167 = scmp.ne.s32.totalorder %s159, %s161
    %p168 = scmp.eq.s32.totalorder %s25, 1
    %p169 = por %p167, %p168
    %p170 = scmp.ne.s32.totalorder %s161, %s162
    %p171 = scmp.eq.s32.totalorder %s25, 0
    %p172 = por %p170, %p171
    %p173 = scmp.ne.s32.totalorder %s161, %s162
    %p174 = scmp.eq.s32.totalorder %s26, 1
    %p175 = por %p173, %p174
    %p177 = scmp.ne.s32.totalorder %s162, %s176
    %p178 = scmp.eq.s32.totalorder %s26, 0
    %p179 = por %p177, %p178
    %s181 = sadd.s32 %s180, 1
    %p184 = scmp.eq.s32.totalorder %s20, 1
    %p185 = scmp.ne.s32.totalorder %s180, %s182
    %p186 = scmp.eq.s32.totalorder %s20, 0
    %p187 = por %p185, %p186
    %p188 = scmp.ne.s32.totalorder %s180, %s182
    %p189 = scmp.eq.s32.totalorder %s25, 1
    %p190 = por %p188, %p189
    %p191 = scmp.ne.s32.totalorder %s182, %s183
    %p192 = scmp.eq.s32.totalorder %s25, 0
    %p193 = por %p191, %p192
    %p194 = scmp.ne.s32.totalorder %s182, %s183
    %p195 = scmp.eq.s32.totalorder %s26, 1
    %p196 = por %p194, %p195
    %p198 = scmp.ne.s32.totalorder %s183, %s197
    %p199 = scmp.eq.s32.totalorder %s26, 0
    %p200 = por %p198, %p199
    %s202 = sadd.s32 %s201, 1
    %p205 = scmp.eq.s32.totalorder %s20, 1
    %p206 = scmp.ne.s32.totalorder %s201, %s203
    %p207 = scmp.eq.s32.totalorder %s20, 0
    %p208 = por %p206, %p207
    %p209 = scmp.ne.s32.totalorder %s201, %s203
    %p210 = scmp.eq.s32.totalorder %s25, 1
    %p211 = por %p209, %p210
    %p212 = scmp.ne.s32.totalorder %s203, %s204
    %p213 = scmp.eq.s32.totalorder %s25, 0
    %p214 = por %p212, %p213
    %p215 = scmp.ne.s32.totalorder %s203, %s204
    %p216 = scmp.eq.s32.totalorder %s26, 1
    %p217 = por %p215, %p216
    %p219 = scmp.ne.s32.totalorder %s204, %s218
    %p220 = scmp.eq.s32.totalorder %s26, 0
    %p221 = por %p219, %p220
    %s223 = sadd.s32 %s222, 1
    %p226 = scmp.eq.s32.totalorder %s20, 1
    %p227 = scmp.ne.s32.totalorder %s222, %s224
    %p228 = scmp.eq.s32.totalorder %s20, 0
    %p229 = por %p227, %p228
    %p230 = scmp.ne.s32.totalorder %s222, %s224
    %p231 = scmp.eq.s32.totalorder %s25, 1
    %p232 = por %p230, %p231
    %p233 = scmp.ne.s32.totalorder %s224, %s225
    %p234 = scmp.eq.s32.totalorder %s25, 0
    %p235 = por %p233, %p234
    %p236 = scmp.ne.s32.totalorder %s224, %s225
    %p237 = scmp.eq.s32.totalorder %s26, 1
    %p238 = por %p236, %p237
    %p240 = scmp.ne.s32.totalorder %s225, %s239
    %p241 = scmp.eq.s32.totalorder %s26, 0
    %p242 = por %p240, %p241
    %s243 = ssub.s32 %s20, %s27
    %p244 = scmp.eq.s32.totalorder %s243, 0
    %s246 = sadd.s32 %s245, 1
    %s247 = scalar_select %p244, %s245, %s246
    %p250 = pneg %p244
    %p251 = scmp.eq.s32.totalorder %s20, 1
    %p252 = por %p250, %p251
    %p253 = scmp.ne.s32.totalorder %s245, %s248
    %p254 = scmp.eq.s32.totalorder %s20, 0
    %p255 = por %p253, %p254
    %p256 = scmp.ne.s32.totalorder %s245, %s248
    %p257 = scmp.eq.s32.totalorder %s25, 1
    %p258 = por %p256, %p257
    %p259 = scmp.ne.s32.totalorder %s248, %s249
    %p260 = scmp.eq.s32.totalorder %s25, 0
    %p261 = por %p259, %p260
    %p262 = scmp.ne.s32.totalorder %s248, %s249
    %p263 = scmp.eq.s32.totalorder %s26, 1
    %p264 = por %p262, %p263
    %p266 = scmp.ne.s32.totalorder %s249, %s265
    %p267 = scmp.eq.s32.totalorder %s26, 0
    %p268 = por %p266, %p267
    %p269 = scmp.le.s32.totalorder 1, %s20
    %p270 = scmp.lt.s32.totalorder %s20, 3
    %p271 = pnand %p269, %p270
    %p272 = pneg %p271
    // Predicated region
    $region9: #{_lambda_.1} parent=5 // pred_check
      _
    $region10: #{_lambda_.1} parent=5 // pred_check_branch
      %274 = sbr.rel (%p271) target = $region12
    $region11: #{_lambda_.1} parent=5 // pred_region
      %s275 = ssub.s32 %s20, 1
      // Predicated region
      $region13: #{_lambda_.1} parent=11 // pred_check
        %p276 = pneg %p67
      $region14: #{_lambda_.1} parent=11 // pred_check_branch
        %278 = sbr.rel (%p276) target = $region16
      $region15: #{_lambda_.1} parent=11 // pred_region
        _
      $region16: #{_lambda_.1} parent=11 // pred_fallthru
        _
      // Predicated region
      $region17: #{_lambda_.1} parent=11 // pred_check
        %p279 = pneg %p88
      $region18: #{_lambda_.1} parent=11 // pred_check_branch
        %281 = sbr.rel (%p279) target = $region20
      $region19: #{_lambda_.1} parent=11 // pred_region
        _
      $region20: #{_lambda_.1} parent=11 // pred_fallthru
        _
      // Predicated region
      $region21: #{_lambda_.1} parent=11 // pred_check
        %p282 = pneg %p109
      $region22: #{_lambda_.1} parent=11 // pred_check_branch
        %284 = sbr.rel (%p282) target = $region24
      $region23: #{_lambda_.1} parent=11 // pred_region
        _
      $region24: #{_lambda_.1} parent=11 // pred_fallthru
        _
      // Predicated region
      $region25: #{_lambda_.1} parent=11 // pred_check
        %p285 = pneg %p130
      $region26: #{_lambda_.1} parent=11 // pred_check_branch
        %287 = sbr.rel (%p285) target = $region28
      $region27: #{_lambda_.1} parent=11 // pred_region
        _
      $region28: #{_lambda_.1} parent=11 // pred_fallthru
        _
      // Predicated region
      $region29: #{_lambda_.1} parent=11 // pred_check
        %p288 = pneg %p151
      $region30: #{_lambda_.1} parent=11 // pred_check_branch
        %290 = sbr.rel (%p288) target = $region32
      $region31: #{_lambda_.1} parent=11 // pred_region
        _
      $region32: #{_lambda_.1} parent=11 // pred_fallthru
        _
      // Predicated region
      $region33: #{_lambda_.1} parent=11 // pred_check
        %p291 = pneg %p172
      $region34: #{_lambda_.1} parent=11 // pred_check_branch
        %293 = sbr.rel (%p291) target = $region36
      $region35: #{_lambda_.1} parent=11 // pred_region
        _
      $region36: #{_lambda_.1} parent=11 // pred_fallthru
        _
      // Predicated region
      $region37: #{_lambda_.1} parent=11 // pred_check
        %p294 = pneg %p193
      $region38: #{_lambda_.1} parent=11 // pred_check_branch
        %296 = sbr.rel (%p294) target = $region40
      $region39: #{_lambda_.1} parent=11 // pred_region
        _
      $region40: #{_lambda_.1} parent=11 // pred_fallthru
        _
      // Predicated region
      $region41: #{_lambda_.1} parent=11 // pred_check
        %p297 = pneg %p214
      $region42: #{_lambda_.1} parent=11 // pred_check_branch
        %299 = sbr.rel (%p297) target = $region44
      $region43: #{_lambda_.1} parent=11 // pred_region
        _
      $region44: #{_lambda_.1} parent=11 // pred_fallthru
        _
      // Predicated region
      $region45: #{_lambda_.1} parent=11 // pred_check
        %p300 = pneg %p235
      $region46: #{_lambda_.1} parent=11 // pred_check_branch
        %302 = sbr.rel (%p300) target = $region48
      $region47: #{_lambda_.1} parent=11 // pred_region
        _
      $region48: #{_lambda_.1} parent=11 // pred_fallthru
        _
    $region12: #{_lambda_.1} parent=5 // pred_fallthru
      _
    %p303 = scmp.lt.s32.totalorder %s20, 2
    // Predicated region
    $region49: #{_lambda_.1} parent=5 // pred_check
      %p304 = pneg %p303
    $region50: #{_lambda_.1} parent=5 // pred_check_branch
      %306 = sbr.rel (%p304) target = $region52
    $region51: #{_lambda_.1} parent=5 // pred_region
      // Predicated region
      $region53: #{_lambda_.1} parent=51 // pred_check
        %p307 = pneg %p40
      $region54: #{_lambda_.1} parent=51 // pred_check_branch
        %309 = sbr.rel (%p307) target = $region56
      $region55: #{_lambda_.1} parent=51 // pred_region
        %p310 = scmp.lt.s32.totalorder %s20, 1
        %s311 = scalar_select %p310, %s20, 1
        %s312 = smul.addr %s311, 2
        %s313 = smul.addr %s312, 4
        %s314 = scalar_lea.vmem %s0, %s313
      $region56: #{_lambda_.1} parent=51 // pred_fallthru
        _
    $region52: #{_lambda_.1} parent=5 // pred_fallthru
      _
    %p315 = scmp.le.s32.totalorder 1, %s20
    %p316 = scmp.lt.s32.totalorder %s20, 3
    %p317 = pnand %p315, %p316
    %p318 = pneg %p317
    // Predicated region
    $region57: #{_lambda_.1} parent=5 // pred_check
      _
    $region58: #{_lambda_.1} parent=5 // pred_check_branch
      %320 = sbr.rel (%p317) target = $region60
    $region59: #{_lambda_.1} parent=5 // pred_region
      %s321 = ssub.s32 %s20, 1
      %p322 = scmp.lt.s32.totalorder %s25, 1
      %s323 = scalar_select %p322, %s25, 1
      %s324 = smul.addr %s323, 2
      %s325 = smul.addr %s324, 4
      %s326 = scalar_lea.vmem %s0, %s325
      %p327 = pneg %p46
      %p328 = pneg %p43
      %p329 = pneg %p67
      %p330 = pneg %p64
      %p331 = pneg %p88
      %p332 = pneg %p85
      %p333 = pneg %p109
      %p334 = pneg %p106
      %p335 = pneg %p130
      %p336 = pneg %p127
      %p337 = pneg %p151
      %p338 = pneg %p148
      %p339 = pneg %p172
      %p340 = pneg %p169
      %p341 = pneg %p193
      %p342 = pneg %p190
      %p343 = pneg %p214
      %p344 = pneg %p211
      %p345 = pneg %p235
      %p346 = pneg %p232
      %p347 = pneg %p261
      %p348 = pneg %p258
      %p349 = scmp.lt.s32.totalorder %s25, 1
      %s350 = scalar_select %p349, %s25, 1
      %s351 = scalar_lea.vmem %s10, %s350
      %p352 = scmp.lt.s32.totalorder %s25, 1
      %s353 = scalar_select %p352, %s25, 1
      %s354 = smul.addr %s353, 2
      %s355 = smul.addr %s354, 4
      %s356 = scalar_lea.vmem %s0, %s355
      %p357 = scmp.lt.s32.totalorder %s25, 1
      %s358 = scalar_select %p357, %s25, 1
      %s359 = scalar_lea.vmem %s10, %s358
      %v361 = vld [vmem:[%s356] sm:$0xf]
      %v362 = vld [vmem:[%s356 + $0x4] sm:$0xf]
      %v363 = vld [vmem:[%s1] sm:$0xf]
      %v364 = vld [vmem:[%s1 + $0x4] sm:$0xf]
      %v365 = vld [vmem:[%s1 + $0x8] sm:$0xf]
      %v366 = vld [vmem:[%s1 + $0xc] sm:$0xf]
      %v367 = vld [vmem:[%s1 + $0x10] sm:$0xf]
      %v368 = vld [vmem:[%s1 + $0x14] sm:$0xf]
      %v369 = vld [vmem:[%s1 + $0x18] sm:$0xf]
      %v370 = vld [vmem:[%s1 + $0x1c] sm:$0xf]
      %v371 = vld [vmem:[%s2] sm:$0x1]
      %v373 = vlaneseq
      %v374 = vshrl.u32 %v373, 7
      %v375 = vsub.s32 0, %v374
      %v376 = vrot.slane %v371, %v375
      %v380 = vunpack.c.l.b16 %v361
      %v381 = vunpack.c.l.b16 %v362
      %v382 = vpack.c.b16 %v381, %v380
      %v391 = vunpack.c.l.b16 %v363
      %v392 = vunpack.c.l.b16 %v364
      %v393 = vunpack.c.l.b16 %v365
      %v394 = vunpack.c.l.b16 %v366
      %v395 = vunpack.c.l.b16 %v367
      %v396 = vunpack.c.l.b16 %v368
      %v397 = vunpack.c.l.b16 %v369
      %v398 = vunpack.c.l.b16 %v370
      %v399 = vpack.c.b16 %v392, %v391
      %v400 = vpack.c.b16 %v394, %v393
      %v401 = vpack.c.b16 %v396, %v395
      %v402 = vpack.c.b16 %v398, %v397
      %vm407 = vcmask 523264
      %v409 = vsel %vm407, %v382, 0
      %411 = vmatprep.subr.bf16.mxu0 0
      %412 = vmatpush1.bf16.msra.mxu0 %v399
      %413 = vmatprep.subr.bf16.mxu0 0
      %414 = vmatpush1.bf16.msra.mxu0 %v400
      %415 = vmatprep.subr.bf16.mxu0 0
      %416 = vmatpush1.bf16.msra.mxu0 %v401
      %417 = vmatprep.subr.bf16.mxu0 0
      %418 = vmatpush1.bf16.msra.mxu0 %v402
      %419 = vmatprep.subr.bf16.mxu0 0
      %420 = vmatpush1.bf16.msra.mxu0 0
      %421 = vmatprep.subr.bf16.mxu0 0
      %422 = vmatpush1.bf16.msra.mxu0 0
      %423 = vmatprep.subr.bf16.mxu0 0
      %424 = vmatpush1.bf16.msra.mxu0 0
      %425 = vmatprep.subr.bf16.mxu0 0
      %426 = vmatpush1.bf16.msra.mxu0 0
      %427 = vmatprep.subr.bf16.mxu0 0
      %428 = vmatpush1.bf16.msra.mxu0 0
      %429 = vmatprep.subr.bf16.mxu0 0
      %430 = vmatpush1.bf16.msra.mxu0 0
      %431 = vmatprep.subr.bf16.mxu0 0
      %432 = vmatpush1.bf16.msra.mxu0 0
      %433 = vmatprep.subr.bf16.mxu0 0
      %434 = vmatpush1.bf16.msra.mxu0 0
      %435 = vmatprep.subr.bf16.mxu0 0
      %436 = vmatpush1.bf16.msra.mxu0 0
      %437 = vmatprep.subr.bf16.mxu0 0
      %438 = vmatpush1.bf16.msra.mxu0 0
      %439 = vmatprep.subr.bf16.mxu0 0
      %440 = vmatpush1.bf16.msra.mxu0 0
      %441 = vmatprep.subr.bf16.mxu0 0
      %442 = vmatpush1.bf16.msra.mxu0 0
      %443 = vmatprep.mubr.bf16.mxu0 0
      %444 = vmatmul.mubr.bf16.gmra.mrb[0].mxu0 %v409
      %v445 = vpop.f32.mrb[0].mxu0
      %v446 = vadd.f32 %v376, %v445
      %v447 = vpop.f32.mrb[0].mxu0
      %v448 = vpop.f32.mrb[0].mxu0
      %v449 = vadd.f32 %v376, %v448
      %v450 = vpop.f32.mrb[0].mxu0
      %451 = vdwg.mxu0
      %v452 = vld [vmem:[%s3] sm:$0xff]
      %v453 = vld [vmem:[%s3 + $0x8] sm:$0xff]
      %v454 = vadd.f32 %v446, %v452
      %v455 = vadd.f32 %v449, %v453
      %v456 = vpack.c.bf16 %v455, %v454
      %v457 = vld [vmem:[%s4] sm:$0xf]
      %v458 = vld [vmem:[%s4 + $0x4] sm:$0xf]
      %v459 = vld [vmem:[%s4 + $0x8] sm:$0xf]
      %v460 = vld [vmem:[%s4 + $0xc] sm:$0xf]
      %v461 = vld [vmem:[%s5] sm:$0x1]
      %v463 = vlaneseq
      %v464 = vshrl.u32 %v463, 7
      %v465 = vsub.s32 0, %v464
      %v466 = vrot.slane %v461, %v465
      %v472 = vunpack.c.l.b16 %v457
      %v473 = vunpack.c.l.b16 %v458
      %v474 = vunpack.c.l.b16 %v459
      %v475 = vunpack.c.l.b16 %v460
      %v476 = vpack.c.b16 %v473, %v472
      %v477 = vpack.c.b16 %v475, %v474
      %vm480 = vcmask 261120
      %v482 = vsel %vm480, %v456, 0
      %484 = vmatprep.subr.bf16.mxu0 0
      %485 = vmatpush1.bf16.msra.mxu0 %v476
      %486 = vmatprep.subr.bf16.mxu0 0
      %487 = vmatpush1.bf16.msra.mxu0 %v477
      %488 = vmatprep.subr.bf16.mxu0 0
      %489 = vmatpush1.bf16.msra.mxu0 0
      %490 = vmatprep.subr.bf16.mxu0 0
      %491 = vmatpush1.bf16.msra.mxu0 0
      %492 = vmatprep.subr.bf16.mxu0 0
      %493 = vmatpush1.bf16.msra.mxu0 0
      %494 = vmatprep.subr.bf16.mxu0 0
      %495 = vmatpush1.bf16.msra.mxu0 0
      %496 = vmatprep.subr.bf16.mxu0 0
      %497 = vmatpush1.bf16.msra.mxu0 0
      %498 = vmatprep.subr.bf16.mxu0 0
      %499 = vmatpush1.bf16.msra.mxu0 0
      %500 = vmatprep.subr.bf16.mxu0 0
      %501 = vmatpush1.bf16.msra.mxu0 0
      %502 = vmatprep.subr.bf16.mxu0 0
      %503 = vmatpush1.bf16.msra.mxu0 0
      %504 = vmatprep.subr.bf16.mxu0 0
      %505 = vmatpush1.bf16.msra.mxu0 0
      %506 = vmatprep.subr.bf16.mxu0 0
      %507 = vmatpush1.bf16.msra.mxu0 0
      %508 = vmatprep.subr.bf16.mxu0 0
      %509 = vmatpush1.bf16.msra.mxu0 0
      %510 = vmatprep.subr.bf16.mxu0 0
      %511 = vmatpush1.bf16.msra.mxu0 0
      %512 = vmatprep.subr.bf16.mxu0 0
      %513 = vmatpush1.bf16.msra.mxu0 0
      %514 = vmatprep.subr.bf16.mxu0 0
      %515 = vmatpush1.bf16.msra.mxu0 0
      %516 = vmatprep.mubr.bf16.mxu0 0
      %517 = vmatmul.mubr.bf16.gmra.mrb[0].mxu0 %v482
      %v518 = vpop.f32.mrb[0].mxu0
      %v519 = vadd.f32 %v466, %v518
      %v520 = vpop.f32.mrb[0].mxu0
      %v521 = vpop.f32.mrb[0].mxu0
      %v522 = vadd.f32 %v466, %v521
      %v523 = vpop.f32.mrb[0].mxu0
      %524 = vdwg.mxu0
      %v525 = vmul.f32 %v519, 0.5
      %v526 = vmul.f32 %v522, 0.5
      %v527 = vmul.f32 %v519, 0.70710677
      %v528 = vmul.f32 %v522, 0.70710677
      %v529 = verf.f32.pop %v527
      %v530 = verf.f32.pop %v528
      %v531 = vadd.f32 %v529, 1.0
      %v532 = vadd.f32 %v530, 1.0
      %v533 = vmul.f32 %v525, %v531
      %v534 = vmul.f32 %v526, %v532
      %v535 = vld [vmem:[%s6] sm:$0x1]
      %v537 = vlaneseq
      %v538 = vshrl.u32 %v537, 7
      %v539 = vsub.s32 0, %v538
      %v540 = vrot.slane %v535, %v539
      %v542 = vmul.f32 %v533, %v540
      %v543 = vmul.f32 %v534, %v540
      %544 = vadd.xlane.f32.xlu0 %v542
      %v545 = vpop.xlane.xlu0 %544
      %546 = vadd.xlane.f32.xlu0 %v543
      %v547 = vpop.xlane.xlu0 %546
      %v548 = vld [vmem:[#allocation2] sm:$0x1]
      %v550 = vlaneseq
      %v551 = vshrl.u32 %v550, 7
      %v552 = vsub.s32 0, %v551
      %v553 = vrot.slane %v548, %v552
      %v555 = vadd.f32 %v545, %v553
      %v556 = vadd.f32 %v547, %v553
      %v557 = vmul.f32 %v555, 0.5
      %v558 = vmul.f32 %v556, 0.5
      %v559 = vmul.f32 %v555, 0.70710677
      %v560 = vmul.f32 %v556, 0.70710677
      %v561 = verf.f32.pop %v559
      %v562 = verf.f32.pop %v560
      %v563 = vadd.f32 %v561, 1.0
      %v564 = vadd.f32 %v562, 1.0
      %v565 = vmul.f32 %v557, %v563
      %v566 = vmul.f32 %v558, %v564
      %v567 = vld [vmem:[%s8] sm:$0xff]
      %v568 = vld [vmem:[%s8 + $0x8] sm:$0xff]
      %v569 = vmul.f32 %v565, %v567
      %v570 = vmul.f32 %v566, %v568
      %vm571 = vcmask 7168
      %v572 = vsel %vm571, %v569, 0.0
      %v573 = vsel %vm571, %v570, 0.0
      %v574 = vadd.f32 %v572, %v573
      %v575 = vrot.slane %v574, 4
      %v576 = vadd.f32 %v574, %v575
      %v577 = vrot.slane %v576, 2
      %v578 = vadd.f32 %v576, %v577
      %v579 = vrot.slane %v578, 1
      %v580 = vadd.f32 %v578, %v579
      %v581 = vld [vmem:[#allocation3] sm:$0x1]
      %v582 = vadd.f32 %v580, %v581
      %v583 = vxor.u32 %v582, 2147483648
      %v584 = vmul.f32 %v583, 1.442695
      %v585 = vpow.pop %v584
      %v586 = vadd.f32 %v585, 1.0
      %v587 = vrcp.pop %v586
      %v588 = vmul.f32 1.0, %v587
      %vm589 = vcmask 0
      %590 = vst.msk [vmem:[%s359] sm:$0x1] %vm589, %v588
      %p591 = scmp.lt.s32.totalorder %s25, 1
      %s592 = scalar_select %p591, %s25, 1
      %s593 = scalar_lea.vmem %s10, %s592
      // Predicated region
      $region61: #{_lambda_.1} parent=59 // pred_check
        %p594 = pneg %p258
      $region62: #{_lambda_.1} parent=59 // pred_check_branch
        %596 = sbr.rel (%p594) target = $region64
      $region63: #{_lambda_.1} parent=59 // pred_region
        _
      $region64: #{_lambda_.1} parent=59 // pred_fallthru
        _
    $region60: #{_lambda_.1} parent=5 // pred_fallthru
      _
    %p597 = scmp.le.s32.totalorder 2, %s20
    // Predicated region
    $region65: #{_lambda_.1} parent=5 // pred_check
      %p598 = pneg %p597
    $region66: #{_lambda_.1} parent=5 // pred_check_branch
      %600 = sbr.rel (%p598) target = $region68
    $region67: #{_lambda_.1} parent=5 // pred_region
      %s601 = ssub.s32 %s20, 2
      // Predicated region
      $region69: #{_lambda_.1} parent=67 // pred_check
        %p602 = pneg %p264
      $region70: #{_lambda_.1} parent=67 // pred_check_branch
        %604 = sbr.rel (%p602) target = $region72
      $region71: #{_lambda_.1} parent=67 // pred_region
        %p605 = scmp.lt.s32.totalorder %s26, 1
        %s606 = scalar_select %p605, %s26, 1
        %s607 = scalar_lea.vmem %s10, %s606
      $region72: #{_lambda_.1} parent=67 // pred_fallthru
        _
    $region68: #{_lambda_.1} parent=5 // pred_fallthru
      _
  $region6: #{_lambda_.1} parent=0 // loop_footer
    %s24 = sadd.s32 1, %s20
  $region7: #{_lambda_.1} parent=0 // loop_footer_branch
    %19 = sbr.rel target = $region3
  $region8: #{_lambda_.1} parent=0 // loop_exit
    _

</llo_original>
